<compile_context>
chip_gen: v7x
topology: tpu7x:2x2x1
jax: 0.10.0
libtpu: 0.0.40
codegen_flags: <defaults>
</compile_context>

<pallas_src>
import functools
import math

import jax
import jax.numpy as jnp
from jax.experimental import pallas as pl
from jax.experimental.pallas import tpu as pltpu


# ---------------------------------------------------------------------------
# helpers
# ---------------------------------------------------------------------------
def _round_up(x, m):
    return ((x + m - 1) // m) * m


def _vmem_capacity_bytes():
    """Physical VMEM of the current chip; conservative fallback (v7x size)."""
    try:
        info = pltpu.get_tpu_info()
        cap = getattr(info, "vmem_capacity_bytes", None)
        if cap:
            return int(cap)
    except Exception:
        pass
    return 64 << 20


def _pick_tile_div(total, t_max, unit):
    """Largest multiple of `unit` that divides `total` and is <= t_max."""
    if total <= t_max:
        return total
    n = total // unit
    best = 1
    for d in range(1, n + 1):
        if n % d == 0 and d * unit <= t_max:
            best = d
    return best * unit


def _pick_tm(M, tm_max, align):
    """Row tile: single tile if it fits, else largest standard tile with
    <~10% padding waste, else the minimum-waste candidate."""
    m_aligned = _round_up(M, align)
    if m_aligned <= tm_max:
        return m_aligned
    cands = sorted(
        {c for c in (tm_max, 512, 384, 256, 128, 64, 32, align)
         if align <= c <= tm_max and c % align == 0},
        reverse=True,
    )
    best, best_waste = cands[-1], 1.0
    for c in cands:
        mp = _round_up(M, c)
        waste = (mp - m_aligned) / mp
        if waste <= 0.10:
            return c
        if waste < best_waste:
            best, best_waste = c, waste
    return best


# ---------------------------------------------------------------------------
# kernels
# ---------------------------------------------------------------------------
def _mm_bias_kernel_acc(x_ref, w_ref, b_ref, o_ref, acc_ref):
    """K-tiled matmul with bias: acc initialised with broadcast bias."""
    k = pl.program_id(2)

    @pl.when(k == 0)
    def _init():
        acc_ref[...] = jnp.broadcast_to(b_ref[...], acc_ref.shape)

    acc_ref[...] += jnp.dot(
        x_ref[...], w_ref[...], preferred_element_type=jnp.float32
    )

    @pl.when(k == pl.num_programs(2) - 1)
    def _finalize():
        o_ref[...] = acc_ref[...].astype(o_ref.dtype)


def _mm_nobias_kernel_acc(x_ref, w_ref, o_ref, acc_ref):
    k = pl.program_id(2)

    @pl.when(k == 0)
    def _init():
        acc_ref[...] = jnp.zeros_like(acc_ref)

    acc_ref[...] += jnp.dot(
        x_ref[...], w_ref[...], preferred_element_type=jnp.float32
    )

    @pl.when(k == pl.num_programs(2) - 1)
    def _finalize():
        o_ref[...] = acc_ref[...].astype(o_ref.dtype)


def _mm_bias_kernel_single(x_ref, w_ref, b_ref, o_ref):
    """Single-pass (full K resident) matmul + bias."""
    o_ref[...] = (
        jnp.dot(x_ref[...], w_ref[...], preferred_element_type=jnp.float32)
        + b_ref[...]
    ).astype(o_ref.dtype)


def _mm_nobias_kernel_single(x_ref, w_ref, o_ref):
    o_ref[...] = jnp.dot(
        x_ref[...], w_ref[...], preferred_element_type=jnp.float32
    ).astype(o_ref.dtype)


# ---------------------------------------------------------------------------
# parameter preparation (do this ONCE at init time; GRAND reuses the weight
# across many propagation steps, so the pad/cast should not be per-call).
# ---------------------------------------------------------------------------
def prepare_mlp_params(weight, bias=None, *, use_bf16=True):
    """Pre-pad weight to (round_up(K,128), round_up(N,128)) and optionally
    pre-cast to bf16; returns (weight, bias, logical_out_features)."""
    K, N = weight.shape
    Kp, Np = _round_up(K, 128), _round_up(N, 128)
    w = weight
    if (Kp, Np) != (K, N):
        w = jnp.pad(w, ((0, Kp - K), (0, Np - N)))
    if use_bf16:
        w = w.astype(jnp.bfloat16)
    b = None
    if bias is not None:
        b = bias.astype(jnp.float32)
        if Np != N:
            b = jnp.pad(b, (0, Np - N))
    return w, b, N


def init_mlp_params(key, in_features, out_features, bias=True):
    """Synthetic init matching MLPLayer.reset_parameters:
    normal(mean=-stdv, std=stdv), stdv = 1/sqrt(out_features)."""
    stdv = 1.0 / math.sqrt(out_features)
    kw, kb = jax.random.split(key)
    weight = (
        jax.random.normal(kw, (in_features, out_features), jnp.float32) * stdv
        - stdv
    )
    b = None
    if bias:
        b = jax.random.normal(kb, (out_features,), jnp.float32) * stdv - stdv
    return weight, b


# ---------------------------------------------------------------------------
# forward
# ---------------------------------------------------------------------------
@functools.partial(
    jax.jit,
    static_argnames=("out_features", "tm", "tn", "tk", "use_bf16", "keep_padded"),
)
def mlp_layer(
    x,
    weight,
    bias=None,
    *,
    out_features=None,
    tm=512,
    tn=512,
    tk=1024,
    use_bf16=False,
    keep_padded=False,
):
    """Pallas implementation of MLPLayer.forward: x @ weight (+ bias)."""
    M, K = x.shape
    Kw, Nw = weight.shape
    Kp = _round_up(K, 128)
    if Kw not in (K, Kp):
        raise ValueError("weight rows must equal in_features (or its 128-pad)")

    Nout = out_features if out_features is not None else Nw
    Np = _round_up(Nout, 128)
    if Nw not in (Nout, Np):
        raise ValueError("weight cols must equal out_features (or its 128-pad)")

    out_dtype = jnp.float32

    # -- compute dtype ------------------------------------------------------
    if use_bf16 or weight.dtype == jnp.bfloat16:
        compute_dtype = jnp.bfloat16
        align = 16          # bf16 min sublane tile is (16, 128)
    else:
        compute_dtype = jnp.float32
        align = 8
    in_elem = jnp.dtype(compute_dtype).itemsize

    # -- tile selection ------------------------------------------------------
    tm_e = _pick_tm(M, tm, align)
    Mp = _round_up(M, tm_e)

    tn_e = _pick_tile_div(Np, tn, 128)
    grid_n = Np // tn_e
    grid_m = Mp // tm_e

    # keep both v7x TensorCores busy if the parallel grid collapsed to 1x1
    if grid_m * grid_n < 2 and tm_e >= 128:
        tm_e = _round_up((tm_e + 1) // 2, align)
        Mp = _round_up(M, tm_e)
        grid_m = Mp // tm_e

    phys = _vmem_capacity_bytes()
    hard_cap = int(phys * 0.85)              # headroom for Mosaic scratch
    work_budget = min(int(phys * 0.6), 48 << 20)
    has_bias = bias is not None

    def vmem_usage(tk_try, k_tiled):
        return (
            2 * tm_e * tk_try * in_elem          # x (double-buffered)
            + 2 * tk_try * tn_e * in_elem        # w (double-buffered)
            + 2 * tm_e * tn_e * 4                # out (double-buffered)
            + (tm_e * tn_e * 4 if k_tiled else 0)  # f32 accumulator
            + (2 * tn_e * 4 if has_bias else 0)  # bias
        )

    # collapse the K axis whenever the full-K stripes fit the budget
    if vmem_usage(Kp, k_tiled=False) <= work_budget:
        tk_e = Kp
    else:
        tk_e = _pick_tile_div(Kp, tk, 128)
        while vmem_usage(tk_e, k_tiled=True) > work_budget and tk_e > 128:
            tk_e = _pick_tile_div(Kp, tk_e // 2, 128)
    grid_k = Kp // tk_e

    # -- pad / cast operands (no-ops if already prepared) --------------------
    if x.dtype != compute_dtype:
        x = x.astype(compute_dtype)
    if weight.dtype != compute_dtype:
        weight = weight.astype(compute_dtype)
    if (Mp, Kp) != x.shape:
        x = jnp.pad(x, ((0, Mp - M), (0, Kp - K)))
    if (Kp, Np) != weight.shape:
        weight = jnp.pad(weight, ((0, Kp - Kw), (0, Np - Nw)))

    b2d = None
    if has_bias:
        b2d = bias.astype(jnp.float32)
        if b2d.shape[0] != Np:
            b2d = jnp.pad(b2d, (0, Np - b2d.shape[0]))
        b2d = b2d.reshape(1, Np)

    # -- pallas_call plumbing -------------------------------------------------
    usage = vmem_usage(tk_e, k_tiled=(grid_k > 1))
    vmem_limit = int(min(max(usage + (4 << 20), 32 << 20), hard_cap))

    cost = pl.CostEstimate(
        flops=2 * Mp * Kp * Np,
        transcendentals=0,
        bytes_accessed=(
            Mp * Kp * in_elem * grid_n          # x re-read once per j tile
            + Kp * Np * in_elem * grid_m        # w re-read once per i tile
            + Mp * Np * 4                       # output written once
            + (Np * 4 * grid_m * grid_n if has_bias else 0)
        ),
    )

    out_shape = jax.ShapeDtypeStruct((Mp, Np), out_dtype)

    if grid_k == 1:
        grid = (grid_m, grid_n)
        x_spec = pl.BlockSpec((tm_e, tk_e), lambda i, j: (i, 0))
        w_spec = pl.BlockSpec((tk_e, tn_e), lambda i, j: (0, j))
        o_spec = pl.BlockSpec((tm_e, tn_e), lambda i, j: (i, j))
        b_spec = pl.BlockSpec((1, tn_e), lambda i, j: (0, j))
        scratch = []
        dims = ("parallel", "parallel")
        kernel = _mm_bias_kernel_single if has_bias else _mm_nobias_kernel_single
    else:
        grid = (grid_m, grid_n, grid_k)
        x_spec = pl.BlockSpec((tm_e, tk_e), lambda i, j, k: (i, k))
        w_spec = pl.BlockSpec((tk_e, tn_e), lambda i, j, k: (k, j))
        o_spec = pl.BlockSpec((tm_e, tn_e), lambda i, j, k: (i, j))
        b_spec = pl.BlockSpec((1, tn_e), lambda i, j, k: (0, j))
        scratch = [pltpu.VMEM((tm_e, tn_e), jnp.float32)]
        dims = ("parallel", "parallel", "arbitrary")
        kernel = _mm_bias_kernel_acc if has_bias else _mm_nobias_kernel_acc

    in_specs = [x_spec, w_spec] + ([b_spec] if has_bias else [])
    operands = (x, weight) + ((b2d,) if has_bias else ())

    out = pl.pallas_call(
        kernel,
        out_shape=out_shape,
        grid_spec=pltpu.PrefetchScalarGridSpec(
            num_scalar_prefetch=0,
            grid=grid,
            in_specs=in_specs,
            out_specs=o_spec,
            scratch_shapes=scratch,
        ),
        compiler_params=pltpu.CompilerParams(
            dimension_semantics=dims,
            vmem_limit_bytes=vmem_limit,
        ),
        cost_estimate=cost,
    )(*operands)

    if keep_padded:
        return out
    if (Mp, Np) != (M, Nout):
        out = out[:M, :Nout]
    return out


# ---------------------------------------------------------------------------
# self-test
# ---------------------------------------------------------------------------
if __name__ == "__main__":
    key = jax.random.PRNGKey(0)
    k_x, k_p, k_x2, k_p2, k_x3, k_p3 = jax.random.split(key, 6)

    # 1) Small shapes, f32 exact path, with bias.
    N, fin, fout = 16, 32, 64
    x = jax.random.normal(k_x, (N, fin), jnp.float32)
    w, b = init_mlp_params(k_p, fin, fout, bias=True)
    out = jax.block_until_ready(mlp_layer(x, w, b, use_bf16=False))
    ref = x @ w + b
    assert out.shape == (N, fout)
    assert jnp.allclose(out, ref, atol=1e-5, rtol=1e-5)

    # 2) Non-aligned shapes, no bias: exercises padding, adaptive row tiling,
    #    and the K-collapse single-pass path.
    N2, fin2, fout2 = 300, 96, 200
    x2 = jax.random.normal(k_x2, (N2, fin2), jnp.float32)
    w2, _ = init_mlp_params(k_p2, fin2, fout2, bias=False)
    out2 = jax.block_until_ready(mlp_layer(x2, w2, None, use_bf16=False))
    ref2 = x2 @ w2
    assert out2.shape == (N2, fout2)
    assert jnp.allclose(out2, ref2, atol=1e-4, rtol=1e-4)

    # 3) bf16 fast path (f32 accumulation) with weights pre-cast / pre-padded
    #    once via prepare_mlp_params, as GRAND would do at init time.
    N3, fin3, fout3 = 256, 384, 160
    x3 = jax.random.normal(k_x3, (N3, fin3), jnp.float32)
    w3, b3 = init_mlp_params(k_p3, fin3, fout3, bias=True)
    w3p, b3p, fout3_logical = prepare_mlp_params(w3, b3, use_bf16=True)
    out3 = jax.block_until_ready(
        mlp_layer(x3, w3p, b3p, out_features=fout3_logical, use_bf16=True)
    )
    ref3 = x3 @ w3 + b3
    assert out3.shape == (N3, fout3)
    assert jnp.allclose(out3, ref3, atol=5e-2, rtol=5e-2)

    print("KERNEL_OK")
</pallas_src>

<mosaic_0001>
module attributes {stable_mosaic.version = 11 : i64} {
  func.func @_mm_bias_kernel_single(%arg0: i32, %arg1: i32, %arg2: memref<16x128xf32, #tpu.memory_space<vmem>>, %arg3: memref<128x128xf32, #tpu.memory_space<vmem>>, %arg4: memref<1x128xf32, #tpu.memory_space<vmem>>, %arg5: memref<16x128xf32, #tpu.memory_space<vmem>>) attributes {dimension_semantics = [#tpu.dimension_semantics<parallel>, #tpu.dimension_semantics<parallel>], iteration_bounds = array<i64: 1, 1>, scalar_prefetch = 0 : i64, scratch_operands = 0 : i64, tpu.core_type = #tpu.core_type<tc>, window_params = [{transform_indices = @transform_0, window_bounds = array<i64: 16, 128>}, {transform_indices = @transform_1, window_bounds = array<i64: 128, 128>}, {transform_indices = @transform_2, window_bounds = array<i64: 1, 128>}, {transform_indices = @transform_3, window_bounds = array<i64: 16, 128>}]} {
    %c0 = arith.constant 0 : index
    %c0_0 = arith.constant 0 : index
    %0 = vector.load %arg2[%c0, %c0_0] : memref<16x128xf32, #tpu.memory_space<vmem>>, vector<16x128xf32>
    %c0_1 = arith.constant 0 : index
    %c0_2 = arith.constant 0 : index
    %1 = vector.load %arg3[%c0_1, %c0_2] : memref<128x128xf32, #tpu.memory_space<vmem>>, vector<128x128xf32>
    %cst = arith.constant dense<0.000000e+00> : vector<16x128xf32>
    %2 = tpu.matmul %0, %1, %cst {dimension_numbers = #tpu.dot_dimension_numbers<[1], [0], [0], [1], [0, 0, 1, 1], [], []>} : vector<16x128xf32>, vector<128x128xf32>, vector<16x128xf32> -> vector<16x128xf32>
    %c0_3 = arith.constant 0 : index
    %c0_4 = arith.constant 0 : index
    %3 = vector.load %arg4[%c0_3, %c0_4] : memref<1x128xf32, #tpu.memory_space<vmem>>, vector<1x128xf32>
    %4 = vector.broadcast %3 : vector<1x128xf32> to vector<16x128xf32>
    %5 = arith.addf %2, %4 : vector<16x128xf32>
    %c0_5 = arith.constant 0 : index
    %c0_6 = arith.constant 0 : index
    %6 = vector.load %arg5[%c0_5, %c0_6] : memref<16x128xf32, #tpu.memory_space<vmem>>, vector<16x128xf32>
    tpu.vector_store %arg5[%c0_5, %c0_6], %5 {strides = array<i32>} : memref<16x128xf32, #tpu.memory_space<vmem>>, vector<16x128xf32>,
    return
  }
  func.func @transform_0(%arg0: i32, %arg1: i32) -> (i32, i32) {
    %c0_i32 = arith.constant 0 : i32
    %c0_i32_0 = arith.constant 0 : i32
    return %arg0, %c0_i32 : i32, i32
  }
  func.func @transform_1(%arg0: i32, %arg1: i32) -> (i32, i32) {
    %c0_i32 = arith.constant 0 : i32
    %c0_i32_0 = arith.constant 0 : i32
    return %c0_i32, %arg1 : i32, i32
  }
  func.func @transform_2(%arg0: i32, %arg1: i32) -> (i32, i32) {
    %c0_i32 = arith.constant 0 : i32
    %c0_i32_0 = arith.constant 0 : i32
    return %c0_i32, %arg1 : i32, i32
  }
  func.func @transform_3(%arg0: i32, %arg1: i32) -> (i32, i32) {
    %c0_i32 = arith.constant 0 : i32
    return %arg0, %arg1 : i32, i32
  }
}

</mosaic_0001>

<llo_original>
// kernel: mlp_layer.1
$region0: #{mlp_layer.1}
  #allocation0 [shape = 'u32[]', space=smem, size = 0x4, offset = 0x4, fixed_abs, tag = 'smem constant byte address 0x4 - core index']
  #allocation1 [shape = 'u32[144,128]{1,0:T(1,128)}', space=vmem, size = 0x12000, scoped, tag = 'internal scratch']
  %s0 = inlined_call_operand.vmem [shape: f32[16,128], index: 0, kind: input, shape index: {}]
  %s1 = inlined_call_operand.vmem [shape: f32[128,128], index: 1, kind: input, shape index: {}]
  %s2 = inlined_call_operand.vmem [shape: f32[1,128], index: 2, kind: input, shape index: {}]
  %s3 = inlined_call_operand.hbm [shape: f32[16,128], index: 3, kind: output, shape index: {}]
  %s4 = sld [smem:[#allocation0]]
  $region22: #{mlp_layer.1} parent=0
    _
  %s6 = ssub.s32 1, %s4
  %s7 = scalar_select 0, %s6, %s4
  $region1: #{mlp_layer.1} parent=0
    #allocation2 [shape = 'u8[8192]{0}', space=vmem, size = 0x2000, scoped, tag = 'output window, operand 0, single buffered']
    #allocation3 [shape = 's32[1]{0}', space=sflag, size = 0x4, scoped, tag = 'scoped memory for mlp_layer.1']
    %8 = vsyncpa [#allocation3], 0
    // Predicated region
    $region2: #{mlp_layer.1} parent=1 // pred_check
      _
    $region3: #{mlp_layer.1} parent=1 // pred_check_branch
      %10 = sbr.rel (0) target = $region5
    $region4: #{mlp_layer.1} parent=1 // pred_region
      _
    $region5: #{mlp_layer.1} parent=1 // pred_fallthru
      _
    // Predicated region
    $region6: #{mlp_layer.1} parent=1 // pred_check
      _
    $region7: #{mlp_layer.1} parent=1 // pred_check_branch
      %12 = sbr.rel (0) target = $region9
    $region8: #{mlp_layer.1} parent=1 // pred_region
      _
    $region9: #{mlp_layer.1} parent=1 // pred_fallthru
      _
    // Predicated region
    $region10: #{mlp_layer.1} parent=1 // pred_check
      _
    $region11: #{mlp_layer.1} parent=1 // pred_check_branch
      %14 = sbr.rel (0) target = $region13
    $region12: #{mlp_layer.1} parent=1 // pred_region
      _
    $region13: #{mlp_layer.1} parent=1 // pred_fallthru
      _
    %v15 = vld [vmem:[%s0] sm:$0xff]
    %v16 = vld [vmem:[%s0 + $0x8] sm:$0xff]
    %v17 = vld [vmem:[%s1] sm:$0xff]
    %v18 = vld [vmem:[%s1 + $0x8] sm:$0xff]
    %v19 = vld [vmem:[%s1 + $0x10] sm:$0xff]
    %v20 = vld [vmem:[%s1 + $0x18] sm:$0xff]
    %v21 = vld [vmem:[%s1 + $0x20] sm:$0xff]
    %v22 = vld [vmem:[%s1 + $0x28] sm:$0xff]
    %v23 = vld [vmem:[%s1 + $0x30] sm:$0xff]
    %v24 = vld [vmem:[%s1 + $0x38] sm:$0xff]
    %v25 = vld [vmem:[%s1 + $0x40] sm:$0xff]
    %v26 = vld [vmem:[%s1 + $0x48] sm:$0xff]
    %v27 = vld [vmem:[%s1 + $0x50] sm:$0xff]
    %v28 = vld [vmem:[%s1 + $0x58] sm:$0xff]
    %v29 = vld [vmem:[%s1 + $0x60] sm:$0xff]
    %v30 = vld [vmem:[%s1 + $0x68] sm:$0xff]
    %v31 = vld [vmem:[%s1 + $0x70] sm:$0xff]
    %v32 = vld [vmem:[%s1 + $0x78] sm:$0xff]
    %v33 = vld [vmem:[%s2] sm:$0x1]
    %v35 = vlaneseq
    %v36 = vshrl.u32 %v35, 7
    %v37 = vsub.s32 0, %v36
    %v38 = vrot.slane %v33, %v37
    %40 = vmatprep.subr.mxu0 0.0
    %41 = vmatpush1.msra.mxu0 %v17
    %42 = vmatprep.subr.mxu0 0.0
    %43 = vmatpush1.msra.mxu0 %v18
    %44 = vmatprep.subr.mxu0 0.0
    %45 = vmatpush1.msra.mxu0 %v19
    %46 = vmatprep.subr.mxu0 0.0
    %47 = vmatpush1.msra.mxu0 %v20
    %48 = vmatprep.subr.mxu0 0.0
    %49 = vmatpush1.msra.mxu0 %v21
    %50 = vmatprep.subr.mxu0 0.0
    %51 = vmatpush1.msra.mxu0 %v22
    %52 = vmatprep.subr.mxu0 0.0
    %53 = vmatpush1.msra.mxu0 %v23
    %54 = vmatprep.subr.mxu0 0.0
    %55 = vmatpush1.msra.mxu0 %v24
    %56 = vmatprep.subr.mxu0 0.0
    %57 = vmatpush1.msra.mxu0 %v25
    %58 = vmatprep.subr.mxu0 0.0
    %59 = vmatpush1.msra.mxu0 %v26
    %60 = vmatprep.subr.mxu0 0.0
    %61 = vmatpush1.msra.mxu0 %v27
    %62 = vmatprep.subr.mxu0 0.0
    %63 = vmatpush1.msra.mxu0 %v28
    %64 = vmatprep.subr.mxu0 0.0
    %65 = vmatpush1.msra.mxu0 %v29
    %66 = vmatprep.subr.mxu0 0.0
    %67 = vmatpush1.msra.mxu0 %v30
    %68 = vmatprep.subr.mxu0 0.0
    %69 = vmatpush1.msra.mxu0 %v31
    %70 = vmatprep.subr.mxu0 0.0
    %71 = vmatpush1.msra.mxu0 %v32
    %72 = vmatprep.subr.mxu0 0.0
    %73 = vmatpush1.msra.mxu0 0.0
    %74 = vmatprep.subr.mxu0 0.0
    %75 = vmatpush1.msra.mxu0 0.0
    %76 = vmatprep.subr.mxu0 0.0
    %77 = vmatpush1.msra.mxu0 0.0
    %78 = vmatprep.subr.mxu0 0.0
    %79 = vmatpush1.msra.mxu0 0.0
    %80 = vmatprep.subr.mxu0 0.0
    %81 = vmatpush1.msra.mxu0 0.0
    %82 = vmatprep.subr.mxu0 0.0
    %83 = vmatpush1.msra.mxu0 0.0
    %84 = vmatprep.subr.mxu0 0.0
    %85 = vmatpush1.msra.mxu0 0.0
    %86 = vmatprep.subr.mxu0 0.0
    %87 = vmatpush1.msra.mxu0 0.0
    %88 = vmatprep.subr.mxu0 0.0
    %89 = vmatpush1.msra.mxu0 0.0
    %90 = vmatprep.subr.mxu0 0.0
    %91 = vmatpush1.msra.mxu0 0.0
    %92 = vmatprep.subr.mxu0 0.0
    %93 = vmatpush1.msra.mxu0 0.0
    %94 = vmatprep.subr.mxu0 0.0
    %95 = vmatpush1.msra.mxu0 0.0
    %96 = vmatprep.subr.mxu0 0.0
    %97 = vmatpush1.msra.mxu0 0.0
    %98 = vmatprep.subr.mxu0 0.0
    %99 = vmatpush1.msra.mxu0 0.0
    %100 = vmatprep.subr.mxu0 0.0
    %101 = vmatpush1.msra.mxu0 0.0
    %102 = vmatprep.subr.mxu0 0.0
    %103 = vmatpush1.msra.mxu0 0.0
    %104 = vmatprep.mubr.f32.mxu0 0.0
    %105 = vmatmul.mubr.f32.gmra.mrb[0].mxu0 %v15
    %v106 = vpop.f32.mrb[0].mxu0
    %v107 = vadd.f32 %v38, %v106
    %v108 = vpop.f32.mrb[0].mxu0
    %109 = vmatprep.mubr.f32.mxu0 0.0
    %110 = vmatmul.mubr.f32.gmra.mrb[0].mxu0 %v16
    %v111 = vpop.f32.mrb[0].mxu0
    %v112 = vadd.f32 %v38, %v111
    %v113 = vpop.f32.mrb[0].mxu0
    %114 = vdwg.mxu0
    %115 = vst [vmem:[#allocation2] sm:$0xff] %v107
    %116 = vst [vmem:[#allocation2 + $0x8] sm:$0xff] %v112
    // Predicated region
    $region14: #{mlp_layer.1} parent=1 // pred_check
      _
    $region15: #{mlp_layer.1} parent=1 // pred_check_branch
      %118 = sbr.rel (0) target = $region17
    $region16: #{mlp_layer.1} parent=1 // pred_region
      %s120 = ssub.s32 256, 256
      %121 = vsyncadd [#allocation3], %s120
      %s122 = sshll.u32 [#allocation2], 4
      %s123 = int_to_ptr.vmem [resolvable:$true] %s122
      %128 = dma.vmem_to_hbm [thread:$0]  %s123, 256, %s3, [#allocation3], 128, 128, 8
    $region17: #{mlp_layer.1} parent=1 // pred_fallthru
      _
    // Predicated region
    $region18: #{mlp_layer.1} parent=1 // pred_check
      _
    $region19: #{mlp_layer.1} parent=1 // pred_check_branch
      %130 = sbr.rel (0) target = $region21
    $region20: #{mlp_layer.1} parent=1 // pred_region
      %131 = dma.done [#allocation3], 256
    $region21: #{mlp_layer.1} parent=1 // pred_fallthru
      _
    %132 = vsyncpa [#allocation3], 1

</llo_original>
